<compile_context>
chip_gen: v6e
topology: v6e:2x2x1
jax: 0.10.0
libtpu: 0.0.40
codegen_flags: <defaults>
</compile_context>

<pallas_src>
import functools

import jax
import jax.numpy as jnp
from jax.experimental import pallas as pl
from jax.experimental.pallas import tpu as pltpu


def _softplus(x):
    # numerically stable softplus: max(x, 0) + log1p(exp(-|x|))
    return jnp.maximum(x, 0.0) + jnp.log1p(jnp.exp(-jnp.abs(x)))


def vae2_kernel(
    xl_ref,                       # (B, x_dim+10)  encoder input [x | label]
    eps_ref,                      # (B, z_dim)     N(0,1) noise
    we1_ref, be1_ref,             # (x_dim+10, H), (1, H)
    we2_ref, be2_ref,             # (H, H),        (1, H)
    wh_ref, bh_ref,               # (H, 2*z_dim),  (1, 2*z_dim)   fused [mu | logvar] head
    wd1z_ref, wd1l_ref, bd1_ref,  # (z_dim, H), (10, H), (1, H)   decoder fc1 (split weight)
    wd2_ref, bd2_ref,             # (H, H),        (1, H)
    wd3_ref, bd3_ref,             # (H, x_dim),    (1, x_dim)
    out_ref,                      # (B, x_dim + 2*z_dim)  packed [x_rec | mu | logvar]
    *, x_dim, z_dim,
):
    f32 = jnp.float32

    xl = xl_ref[...]
    label = xl[:, x_dim:]                         # static lane slice of the packed input

    # ---- Encoder trunk: Linear -> Softplus -> Linear -> Softplus
    h = jnp.dot(xl, we1_ref[...], preferred_element_type=f32)
    h = _softplus(h + be1_ref[...])
    h = jnp.dot(h, we2_ref[...], preferred_element_type=f32)
    h = _softplus(h + be2_ref[...])

    # ---- Fused mu/logvar heads: one matmul, slice in VMEM
    heads = jnp.dot(h, wh_ref[...], preferred_element_type=f32) + bh_ref[...]
    mu = heads[:, :z_dim]
    logvar = _softplus(heads[:, z_dim:])          # reference applies softplus to logvar

    # ---- Reparameterization: z = mu + eps * exp(logvar / 2)
    z = mu + eps_ref[...] * jnp.exp(0.5 * logvar)

    # ---- Decoder on cat([z, label]): split weight avoids an in-kernel lane concat
    g = (jnp.dot(z, wd1z_ref[...], preferred_element_type=f32)
         + jnp.dot(label, wd1l_ref[...], preferred_element_type=f32)
         + bd1_ref[...])
    g = _softplus(g)
    g = jnp.dot(g, wd2_ref[...], preferred_element_type=f32)
    g = _softplus(g + bd2_ref[...])
    x_reconst = jax.nn.sigmoid(
        jnp.dot(g, wd3_ref[...], preferred_element_type=f32) + bd3_ref[...]
    )

    # ---- Single lane-dense packed store: [x_reconst | mu | logvar]
    out_ref[...] = jnp.concatenate([x_reconst, mu, logvar], axis=-1)


def vae2_forward(x, label, eps, params):
    """x: (B, x_dim), label: (B, 10), eps: (B, z_dim) ~ N(0,1).

    params weights are (in_features, out_features) -- transposed vs. torch.nn.Linear.
    Returns (x_reconst, mu, logvar).
    """
    B, x_dim = x.shape
    z_dim = eps.shape[1]
    h_dim = params["we1"].shape[1]

    xl = jnp.concatenate([x, label], axis=-1)     # encoder input, built outside the kernel

    # advisory cost estimate (kernel is tiny / latency-bound)
    flops = 2 * B * ((x_dim + 10) * h_dim + h_dim * h_dim + h_dim * 2 * z_dim
                     + z_dim * h_dim + 10 * h_dim + h_dim * h_dim + h_dim * x_dim)
    transcendentals = B * (4 * 2 * h_dim + 2 * 2 * z_dim + z_dim + x_dim)
    bytes_accessed = 4 * (int(xl.size) + int(eps.size)
                          + sum(int(v.size) for v in params.values())
                          + B * (x_dim + 2 * z_dim))

    vmem = pl.BlockSpec(memory_space=pltpu.MemorySpace.VMEM)

    packed = pl.pallas_call(
        functools.partial(vae2_kernel, x_dim=x_dim, z_dim=z_dim),
        out_shape=jax.ShapeDtypeStruct((B, x_dim + 2 * z_dim), jnp.float32),
        in_specs=[vmem] * 15,
        out_specs=vmem,
        cost_estimate=pl.CostEstimate(
            flops=flops,
            transcendentals=transcendentals,
            bytes_accessed=bytes_accessed,
        ),
    )(
        xl, eps,
        params["we1"], params["be1"],
        params["we2"], params["be2"],
        params["wh"], params["bh"],
        params["wd1z"], params["wd1l"], params["bd1"],
        params["wd2"], params["bd2"],
        params["wd3"], params["bd3"],
    )

    x_reconst = packed[:, :x_dim]
    mu = packed[:, x_dim:x_dim + z_dim]
    logvar = packed[:, x_dim + z_dim:]
    return x_reconst, mu, logvar


def init_params(key, x_dim, h_dim, z_dim, std=1e-3):
    """Matches VAE2.init_weights: weight ~ N(0, 0.001), bias = 0."""
    ks = jax.random.split(key, 7)

    def w(k, shape):
        return std * jax.random.normal(k, shape, jnp.float32)

    def b(shape):
        return jnp.zeros(shape, jnp.float32)

    return dict(
        # encoder
        we1=w(ks[0], (x_dim + 10, h_dim)), be1=b((1, h_dim)),
        we2=w(ks[1], (h_dim, h_dim)),      be2=b((1, h_dim)),
        wh=w(ks[2], (h_dim, 2 * z_dim)),   bh=b((1, 2 * z_dim)),   # fused [mu | logvar]
        # decoder (fc1 weight split into z-part and label-part)
        wd1z=w(ks[3], (z_dim, h_dim)), wd1l=w(ks[4], (10, h_dim)), bd1=b((1, h_dim)),
        wd2=w(ks[5], (h_dim, h_dim)),      bd2=b((1, h_dim)),
        wd3=w(ks[6], (h_dim, x_dim)),      bd3=b((1, x_dim)),
    )


if __name__ == "__main__":
    # small shapes consistent with the module
    B, x_dim, h_dim, z_dim = 8, 16, 32, 8

    key = jax.random.PRNGKey(0)
    kx, kl, ke, kp = jax.random.split(key, 4)

    x = jax.random.uniform(kx, (B, x_dim), jnp.float32)
    label = jax.nn.one_hot(
        jax.random.randint(kl, (B,), 0, 10), 10, dtype=jnp.float32)
    eps = jax.random.normal(ke, (B, z_dim), jnp.float32)   # torch.randn_like(std)
    params = init_params(kp, x_dim, h_dim, z_dim)

    x_reconst, mu, logvar = vae2_forward(x, label, eps, params)
    jax.block_until_ready((x_reconst, mu, logvar))

    # pure-JAX reference check of the fused kernel
    def ref_forward(x, label, eps, p):
        sp = jax.nn.softplus
        xl = jnp.concatenate([x, label], -1)
        h = sp(sp(xl @ p["we1"] + p["be1"]) @ p["we2"] + p["be2"])
        heads = h @ p["wh"] + p["bh"]
        mu = heads[:, :z_dim]
        lv = sp(heads[:, z_dim:])
        z = mu + eps * jnp.exp(0.5 * lv)
        g = sp(z @ p["wd1z"] + label @ p["wd1l"] + p["bd1"])
        g = sp(g @ p["wd2"] + p["bd2"])
        return jax.nn.sigmoid(g @ p["wd3"] + p["bd3"]), mu, lv

    xr_r, mu_r, lv_r = ref_forward(x, label, eps, params)
    assert x_reconst.shape == (B, x_dim)
    assert mu.shape == (B, z_dim)
    assert logvar.shape == (B, z_dim)
    assert bool(jnp.all(jnp.isfinite(x_reconst)))
    assert bool(jnp.all((x_reconst >= 0.0) & (x_reconst <= 1.0)))
    assert bool(jnp.all(logvar >= 0.0))          # softplus output
    assert bool(jnp.allclose(x_reconst, xr_r, atol=1e-5))
    assert bool(jnp.allclose(mu, mu_r, atol=1e-5))
    assert bool(jnp.allclose(logvar, lv_r, atol=1e-5))
    print("KERNEL_OK")
</pallas_src>

<mosaic_0001>
module attributes {stable_mosaic.version = 11 : i64} {
  func.func @vae2_kernel(%arg0: memref<8x26xf32, #tpu.memory_space<vmem>>, %arg1: memref<8x8xf32, #tpu.memory_space<vmem>>, %arg2: memref<26x32xf32, #tpu.memory_space<vmem>>, %arg3: memref<1x32xf32, #tpu.memory_space<vmem>>, %arg4: memref<32x32xf32, #tpu.memory_space<vmem>>, %arg5: memref<1x32xf32, #tpu.memory_space<vmem>>, %arg6: memref<32x16xf32, #tpu.memory_space<vmem>>, %arg7: memref<1x16xf32, #tpu.memory_space<vmem>>, %arg8: memref<8x32xf32, #tpu.memory_space<vmem>>, %arg9: memref<10x32xf32, #tpu.memory_space<vmem>>, %arg10: memref<1x32xf32, #tpu.memory_space<vmem>>, %arg11: memref<32x32xf32, #tpu.memory_space<vmem>>, %arg12: memref<1x32xf32, #tpu.memory_space<vmem>>, %arg13: memref<32x16xf32, #tpu.memory_space<vmem>>, %arg14: memref<1x16xf32, #tpu.memory_space<vmem>>, %arg15: memref<8x32xf32, #tpu.memory_space<vmem>>) attributes {dimension_semantics = [], scalar_prefetch = 0 : i64, scratch_operands = 0 : i64, tpu.core_type = #tpu.core_type<tc>} {
    %c0 = arith.constant 0 : index
    %c0_0 = arith.constant 0 : index
    %0 = vector.load %arg0[%c0, %c0_0] : memref<8x26xf32, #tpu.memory_space<vmem>>, vector<8x26xf32>
    %1 = vector.extract_strided_slice %0 {offsets = [0, 16], sizes = [8, 10], strides = [1, 1]} : vector<8x26xf32> to vector<8x10xf32>
    %c0_1 = arith.constant 0 : index
    %c0_2 = arith.constant 0 : index
    %2 = vector.load %arg2[%c0_1, %c0_2] : memref<26x32xf32, #tpu.memory_space<vmem>>, vector<26x32xf32>
    %cst = arith.constant dense<0.000000e+00> : vector<8x32xf32>
    %3 = tpu.matmul %0, %2, %cst {dimension_numbers = #tpu.dot_dimension_numbers<[1], [0], [0], [1], [0, 0, 1, 1], [], []>} : vector<8x26xf32>, vector<26x32xf32>, vector<8x32xf32> -> vector<8x32xf32>
    %c0_3 = arith.constant 0 : index
    %c0_4 = arith.constant 0 : index
    %4 = vector.load %arg3[%c0_3, %c0_4] : memref<1x32xf32, #tpu.memory_space<vmem>>, vector<1x32xf32>
    %5 = vector.broadcast %4 : vector<1x32xf32> to vector<8x32xf32>
    %6 = arith.addf %3, %5 : vector<8x32xf32>
    %cst_5 = arith.constant 0.000000e+00 : f32
    %7 = vector.broadcast %cst_5 : f32 to vector<8x32xf32>
    %8 = arith.maximumf %6, %7 : vector<8x32xf32>
    %9 = math.absf %6 : vector<8x32xf32>
    %cst_6 = arith.constant 0.000000e+00 : f32
    %10 = vector.broadcast %cst_6 : f32 to vector<8x32xf32>
    %11 = arith.subf %10, %9 : vector<8x32xf32>
    %12 = math.exp %11 : vector<8x32xf32>
    %13 = math.log1p %12 : vector<8x32xf32>
    %14 = arith.addf %8, %13 : vector<8x32xf32>
    %c0_7 = arith.constant 0 : index
    %c0_8 = arith.constant 0 : index
    %15 = vector.load %arg4[%c0_7, %c0_8] : memref<32x32xf32, #tpu.memory_space<vmem>>, vector<32x32xf32>
    %cst_9 = arith.constant dense<0.000000e+00> : vector<8x32xf32>
    %16 = tpu.matmul %14, %15, %cst_9 {dimension_numbers = #tpu.dot_dimension_numbers<[1], [0], [0], [1], [0, 0, 1, 1], [], []>} : vector<8x32xf32>, vector<32x32xf32>, vector<8x32xf32> -> vector<8x32xf32>
    %c0_10 = arith.constant 0 : index
    %c0_11 = arith.constant 0 : index
    %17 = vector.load %arg5[%c0_10, %c0_11] : memref<1x32xf32, #tpu.memory_space<vmem>>, vector<1x32xf32>
    %18 = vector.broadcast %17 : vector<1x32xf32> to vector<8x32xf32>
    %19 = arith.addf %16, %18 : vector<8x32xf32>
    %cst_12 = arith.constant 0.000000e+00 : f32
    %20 = vector.broadcast %cst_12 : f32 to vector<8x32xf32>
    %21 = arith.maximumf %19, %20 : vector<8x32xf32>
    %22 = math.absf %19 : vector<8x32xf32>
    %cst_13 = arith.constant 0.000000e+00 : f32
    %23 = vector.broadcast %cst_13 : f32 to vector<8x32xf32>
    %24 = arith.subf %23, %22 : vector<8x32xf32>
    %25 = math.exp %24 : vector<8x32xf32>
    %26 = math.log1p %25 : vector<8x32xf32>
    %27 = arith.addf %21, %26 : vector<8x32xf32>
    %c0_14 = arith.constant 0 : index
    %c0_15 = arith.constant 0 : index
    %28 = vector.load %arg6[%c0_14, %c0_15] : memref<32x16xf32, #tpu.memory_space<vmem>>, vector<32x16xf32>
    %cst_16 = arith.constant dense<0.000000e+00> : vector<8x16xf32>
    %29 = tpu.matmul %27, %28, %cst_16 {dimension_numbers = #tpu.dot_dimension_numbers<[1], [0], [0], [1], [0, 0, 1, 1], [], []>} : vector<8x32xf32>, vector<32x16xf32>, vector<8x16xf32> -> vector<8x16xf32>
    %c0_17 = arith.constant 0 : index
    %c0_18 = arith.constant 0 : index
    %30 = vector.load %arg7[%c0_17, %c0_18] : memref<1x16xf32, #tpu.memory_space<vmem>>, vector<1x16xf32>
    %31 = vector.broadcast %30 : vector<1x16xf32> to vector<8x16xf32>
    %32 = arith.addf %29, %31 : vector<8x16xf32>
    %33 = vector.extract_strided_slice %32 {offsets = [0, 0], sizes = [8, 8], strides = [1, 1]} : vector<8x16xf32> to vector<8x8xf32>
    %34 = vector.extract_strided_slice %32 {offsets = [0, 8], sizes = [8, 8], strides = [1, 1]} : vector<8x16xf32> to vector<8x8xf32>
    %cst_19 = arith.constant 0.000000e+00 : f32
    %35 = vector.broadcast %cst_19 : f32 to vector<8x8xf32>
    %36 = arith.maximumf %34, %35 : vector<8x8xf32>
    %37 = math.absf %34 : vector<8x8xf32>
    %cst_20 = arith.constant 0.000000e+00 : f32
    %38 = vector.broadcast %cst_20 : f32 to vector<8x8xf32>
    %39 = arith.subf %38, %37 : vector<8x8xf32>
    %40 = math.exp %39 : vector<8x8xf32>
    %41 = math.log1p %40 : vector<8x8xf32>
    %42 = arith.addf %36, %41 : vector<8x8xf32>
    %c0_21 = arith.constant 0 : index
    %c0_22 = arith.constant 0 : index
    %43 = vector.load %arg1[%c0_21, %c0_22] : memref<8x8xf32, #tpu.memory_space<vmem>>, vector<8x8xf32>
    %cst_23 = arith.constant 5.000000e-01 : f32
    %44 = vector.broadcast %cst_23 : f32 to vector<8x8xf32>
    %45 = arith.mulf %44, %42 : vector<8x8xf32>
    %46 = math.exp %45 : vector<8x8xf32>
    %47 = arith.mulf %43, %46 : vector<8x8xf32>
    %48 = arith.addf %33, %47 : vector<8x8xf32>
    %c0_24 = arith.constant 0 : index
    %c0_25 = arith.constant 0 : index
    %49 = vector.load %arg8[%c0_24, %c0_25] : memref<8x32xf32, #tpu.memory_space<vmem>>, vector<8x32xf32>
    %cst_26 = arith.constant dense<0.000000e+00> : vector<8x32xf32>
    %50 = tpu.matmul %48, %49, %cst_26 {dimension_numbers = #tpu.dot_dimension_numbers<[1], [0], [0], [1], [0, 0, 1, 1], [], []>} : vector<8x8xf32>, vector<8x32xf32>, vector<8x32xf32> -> vector<8x32xf32>
    %c0_27 = arith.constant 0 : index
    %c0_28 = arith.constant 0 : index
    %51 = vector.load %arg9[%c0_27, %c0_28] : memref<10x32xf32, #tpu.memory_space<vmem>>, vector<10x32xf32>
    %cst_29 = arith.constant dense<0.000000e+00> : vector<8x32xf32>
    %52 = tpu.matmul %1, %51, %cst_29 {dimension_numbers = #tpu.dot_dimension_numbers<[1], [0], [0], [1], [0, 0, 1, 1], [], []>} : vector<8x10xf32>, vector<10x32xf32>, vector<8x32xf32> -> vector<8x32xf32>
    %53 = arith.addf %50, %52 : vector<8x32xf32>
    %c0_30 = arith.constant 0 : index
    %c0_31 = arith.constant 0 : index
    %54 = vector.load %arg10[%c0_30, %c0_31] : memref<1x32xf32, #tpu.memory_space<vmem>>, vector<1x32xf32>
    %55 = vector.broadcast %54 : vector<1x32xf32> to vector<8x32xf32>
    %56 = arith.addf %53, %55 : vector<8x32xf32>
    %cst_32 = arith.constant 0.000000e+00 : f32
    %57 = vector.broadcast %cst_32 : f32 to vector<8x32xf32>
    %58 = arith.maximumf %56, %57 : vector<8x32xf32>
    %59 = math.absf %56 : vector<8x32xf32>
    %cst_33 = arith.constant 0.000000e+00 : f32
    %60 = vector.broadcast %cst_33 : f32 to vector<8x32xf32>
    %61 = arith.subf %60, %59 : vector<8x32xf32>
    %62 = math.exp %61 : vector<8x32xf32>
    %63 = math.log1p %62 : vector<8x32xf32>
    %64 = arith.addf %58, %63 : vector<8x32xf32>
    %c0_34 = arith.constant 0 : index
    %c0_35 = arith.constant 0 : index
    %65 = vector.load %arg11[%c0_34, %c0_35] : memref<32x32xf32, #tpu.memory_space<vmem>>, vector<32x32xf32>
    %cst_36 = arith.constant dense<0.000000e+00> : vector<8x32xf32>
    %66 = tpu.matmul %64, %65, %cst_36 {dimension_numbers = #tpu.dot_dimension_numbers<[1], [0], [0], [1], [0, 0, 1, 1], [], []>} : vector<8x32xf32>, vector<32x32xf32>, vector<8x32xf32> -> vector<8x32xf32>
    %c0_37 = arith.constant 0 : index
    %c0_38 = arith.constant 0 : index
    %67 = vector.load %arg12[%c0_37, %c0_38] : memref<1x32xf32, #tpu.memory_space<vmem>>, vector<1x32xf32>
    %68 = vector.broadcast %67 : vector<1x32xf32> to vector<8x32xf32>
    %69 = arith.addf %66, %68 : vector<8x32xf32>
    %cst_39 = arith.constant 0.000000e+00 : f32
    %70 = vector.broadcast %cst_39 : f32 to vector<8x32xf32>
    %71 = arith.maximumf %69, %70 : vector<8x32xf32>
    %72 = math.absf %69 : vector<8x32xf32>
    %cst_40 = arith.constant 0.000000e+00 : f32
    %73 = vector.broadcast %cst_40 : f32 to vector<8x32xf32>
    %74 = arith.subf %73, %72 : vector<8x32xf32>
    %75 = math.exp %74 : vector<8x32xf32>
    %76 = math.log1p %75 : vector<8x32xf32>
    %77 = arith.addf %71, %76 : vector<8x32xf32>
    %c0_41 = arith.constant 0 : index
    %c0_42 = arith.constant 0 : index
    %78 = vector.load %arg13[%c0_41, %c0_42] : memref<32x16xf32, #tpu.memory_space<vmem>>, vector<32x16xf32>
    %cst_43 = arith.constant dense<0.000000e+00> : vector<8x16xf32>
    %79 = tpu.matmul %77, %78, %cst_43 {dimension_numbers = #tpu.dot_dimension_numbers<[1], [0], [0], [1], [0, 0, 1, 1], [], []>} : vector<8x32xf32>, vector<32x16xf32>, vector<8x16xf32> -> vector<8x16xf32>
    %c0_44 = arith.constant 0 : index
    %c0_45 = arith.constant 0 : index
    %80 = vector.load %arg14[%c0_44, %c0_45] : memref<1x16xf32, #tpu.memory_space<vmem>>, vector<1x16xf32>
    %81 = vector.broadcast %80 : vector<1x16xf32> to vector<8x16xf32>
    %82 = arith.addf %79, %81 : vector<8x16xf32>
    %83 = arith.negf %82 : vector<8x16xf32>
    %84 = math.exp %83 : vector<8x16xf32>
    %cst_46 = arith.constant 1.000000e+00 : f32
    %85 = vector.broadcast %cst_46 : f32 to vector<8x16xf32>
    %86 = arith.addf %85, %84 : vector<8x16xf32>
    %87 = arith.divf %85, %86 : vector<8x16xf32>
    %88 = tpu.concatenate %87, %33, %42 in 1 : vector<8x16xf32>, vector<8x8xf32>, vector<8x8xf32> -> vector<8x32xf32>
    %c0_47 = arith.constant 0 : index
    %c0_48 = arith.constant 0 : index
    %89 = vector.load %arg15[%c0_47, %c0_48] : memref<8x32xf32, #tpu.memory_space<vmem>>, vector<8x32xf32>
    tpu.vector_store %arg15[%c0_47, %c0_48], %88 {strides = array<i32>} : memref<8x32xf32, #tpu.memory_space<vmem>>, vector<8x32xf32>,
    return
  }
}

</mosaic_0001>

<llo_original>
// kernel: tpu_custom_call.1
$region0: #{tpu_custom_call.1}
  #allocation0 [shape = 'u32[]', space=smem, size = 0x4, offset = 0x4, fixed_abs, tag = 'smem constant byte address 0x4 - core index']
  #allocation1 [shape = 'u32[144,128]{1,0:T(1,128)}', space=vmem, size = 0x12000, scoped, tag = 'internal scratch']
  %s0 = inlined_call_operand.hbm [shape: f32[8,26], index: 0, kind: input, shape index: {}]
  %s1 = inlined_call_operand.hbm [shape: f32[8,8], index: 1, kind: input, shape index: {}]
  %s2 = inlined_call_operand.vmem [shape: f32[26,32], index: 2, kind: input, shape index: {}]
  %s3 = inlined_call_operand.hbm [shape: f32[1,32], index: 3, kind: input, shape index: {}]
  %s4 = inlined_call_operand.vmem [shape: f32[32,32], index: 4, kind: input, shape index: {}]
  %s5 = inlined_call_operand.hbm [shape: f32[1,32], index: 5, kind: input, shape index: {}]
  %s6 = inlined_call_operand.vmem [shape: f32[32,16], index: 6, kind: input, shape index: {}]
  %s7 = inlined_call_operand.hbm [shape: f32[1,16], index: 7, kind: input, shape index: {}]
  %s8 = inlined_call_operand.hbm [shape: f32[8,32], index: 8, kind: input, shape index: {}]
  %s9 = inlined_call_operand.hbm [shape: f32[10,32], index: 9, kind: input, shape index: {}]
  %s10 = inlined_call_operand.vmem [shape: f32[1,32], index: 10, kind: input, shape index: {}]
  %s11 = inlined_call_operand.vmem [shape: f32[32,32], index: 11, kind: input, shape index: {}]
  %s12 = inlined_call_operand.vmem [shape: f32[1,32], index: 12, kind: input, shape index: {}]
  %s13 = inlined_call_operand.vmem [shape: f32[32,16], index: 13, kind: input, shape index: {}]
  %s14 = inlined_call_operand.vmem [shape: f32[1,16], index: 14, kind: input, shape index: {}]
  %s15 = inlined_call_operand.hbm [shape: f32[8,32], index: 15, kind: output, shape index: {}]
  %s16 = sld [smem:[#allocation0]]
  $region98: #{tpu_custom_call.1} parent=0
    _
  %s18 = ssub.s32 1, %s16
  %s19 = scalar_select 0, %s18, %s16
  $region1: #{tpu_custom_call.1} parent=0
    #allocation2 [shape = 'u8[4096]{0}', space=vmem, size = 0x1000, scoped, tag = 'input window, operand 0, single buffered']
    #allocation3 [shape = 's32[1]{0}', space=sflag, size = 0x4, scoped, tag = 'scoped memory for tpu_custom_call.1']
    #allocation4 [shape = 's32[1]{0}', space=sflag, size = 0x4, scoped, tag = 'scoped memory for tpu_custom_call.1']
    #allocation5 [shape = 'u8[4096]{0}', space=vmem, size = 0x1000, scoped, tag = 'input window, operand 1, single buffered']
    #allocation6 [shape = 's32[1]{0}', space=sflag, size = 0x4, scoped, tag = 'scoped memory for tpu_custom_call.1']
    #allocation7 [shape = 'u8[512]{0}', space=vmem, size = 0x400, scoped, tag = 'input window, operand 3, single buffered']
    #allocation8 [shape = 'u8[512]{0}', space=vmem, size = 0x400, scoped, tag = 'input window, operand 5, single buffered']
    #allocation9 [shape = 's32[1]{0}', space=sflag, size = 0x4, scoped, tag = 'scoped memory for tpu_custom_call.1']
    #allocation10 [shape = 'u8[512]{0}', space=vmem, size = 0x400, scoped, tag = 'input window, operand 7, single buffered']
    #allocation11 [shape = 'u8[4096]{0}', space=vmem, size = 0x1000, scoped, tag = 'input window, operand 8, single buffered']
    #allocation12 [shape = 's32[1]{0}', space=sflag, size = 0x4, scoped, tag = 'scoped memory for tpu_custom_call.1']
    #allocation13 [shape = 'u8[8192]{0}', space=vmem, size = 0x2000, scoped, tag = 'input window, operand 9, single buffered']
    #allocation14 [shape = 'u8[4096]{0}', space=vmem, size = 0x1000, scoped, tag = 'output window, operand 0, single buffered']
    %20 = vsyncpa [#allocation3], 0
    %21 = vsyncpa [#allocation6], 0
    %22 = vsyncpa [#allocation9], 0
    %23 = vsyncpa [#allocation12], 0
    %24 = vsyncpa [#allocation4], 0
    // Predicated region
    $region2: #{tpu_custom_call.1} parent=1 // pred_check
      _
    $region3: #{tpu_custom_call.1} parent=1 // pred_check_branch
      %26 = sbr.rel (0) target = $region5
    $region4: #{tpu_custom_call.1} parent=1 // pred_region
      %s28 = ssub.s32 128, 128
      %29 = vsyncadd [#allocation3], %s28
      %s31 = sshll.u32 [#allocation2], 4
      %s32 = int_to_ptr.vmem [resolvable:$true] %s31
      %34 = dma.hbm_to_vmem [thread:$0]  %s0, 128, %s32, [#allocation3]
    $region5: #{tpu_custom_call.1} parent=1 // pred_fallthru
      _
    // Predicated region
    $region6: #{tpu_custom_call.1} parent=1 // pred_check
      _
    $region7: #{tpu_custom_call.1} parent=1 // pred_check_branch
      %36 = sbr.rel (0) target = $region9
    $region8: #{tpu_custom_call.1} parent=1 // pred_region
      %s38 = ssub.s32 128, 128
      %39 = vsyncadd [#allocation6], %s38
      %s41 = sshll.u32 [#allocation5], 4
      %s42 = int_to_ptr.vmem [resolvable:$true] %s41
      %44 = dma.hbm_to_vmem [thread:$0]  %s1, 128, %s42, [#allocation6]
    $region9: #{tpu_custom_call.1} parent=1 // pred_fallthru
      _
    // Predicated region
    $region10: #{tpu_custom_call.1} parent=1 // pred_check
      _
    $region11: #{tpu_custom_call.1} parent=1 // pred_check_branch
      %46 = sbr.rel (0) target = $region13
    $region12: #{tpu_custom_call.1} parent=1 // pred_region
      _
    $region13: #{tpu_custom_call.1} parent=1 // pred_fallthru
      _
    // Predicated region
    $region14: #{tpu_custom_call.1} parent=1 // pred_check
      _
    $region15: #{tpu_custom_call.1} parent=1 // pred_check_branch
      %48 = sbr.rel (0) target = $region17
    $region16: #{tpu_custom_call.1} parent=1 // pred_region
      %s50 = ssub.s32 16, 16
      %51 = vsyncadd [#allocation6], %s50
      %s53 = sshll.u32 [#allocation7], 4
      %s54 = int_to_ptr.vmem [resolvable:$true] %s53
      %56 = dma.hbm_to_vmem [thread:$0]  %s3, 16, %s54, [#allocation6]
    $region17: #{tpu_custom_call.1} parent=1 // pred_fallthru
      _
    // Predicated region
    $region18: #{tpu_custom_call.1} parent=1 // pred_check
      _
    $region19: #{tpu_custom_call.1} parent=1 // pred_check_branch
      %58 = sbr.rel (0) target = $region21
    $region20: #{tpu_custom_call.1} parent=1 // pred_region
      _
    $region21: #{tpu_custom_call.1} parent=1 // pred_fallthru
      _
    // Predicated region
    $region22: #{tpu_custom_call.1} parent=1 // pred_check
      _
    $region23: #{tpu_custom_call.1} parent=1 // pred_check_branch
      %60 = sbr.rel (0) target = $region25
    $region24: #{tpu_custom_call.1} parent=1 // pred_region
      %s62 = ssub.s32 16, 16
      %63 = vsyncadd [#allocation9], %s62
      %s65 = sshll.u32 [#allocation8], 4
      %s66 = int_to_ptr.vmem [resolvable:$true] %s65
      %68 = dma.hbm_to_vmem [thread:$0]  %s5, 16, %s66, [#allocation9]
    $region25: #{tpu_custom_call.1} parent=1 // pred_fallthru
      _
    // Predicated region
    $region26: #{tpu_custom_call.1} parent=1 // pred_check
      _
    $region27: #{tpu_custom_call.1} parent=1 // pred_check_branch
      %70 = sbr.rel (0) target = $region29
    $region28: #{tpu_custom_call.1} parent=1 // pred_region
      _
    $region29: #{tpu_custom_call.1} parent=1 // pred_fallthru
      _
    // Predicated region
    $region30: #{tpu_custom_call.1} parent=1 // pred_check
      _
    $region31: #{tpu_custom_call.1} parent=1 // pred_check_branch
      %72 = sbr.rel (0) target = $region33
    $region32: #{tpu_custom_call.1} parent=1 // pred_region
      %s74 = ssub.s32 16, 16
      %75 = vsyncadd [#allocation9], %s74
      %s77 = sshll.u32 [#allocation10], 4
      %s78 = int_to_ptr.vmem [resolvable:$true] %s77
      %80 = dma.hbm_to_vmem [thread:$0]  %s7, 16, %s78, [#allocation9]
    $region33: #{tpu_custom_call.1} parent=1 // pred_fallthru
      _
    // Predicated region
    $region34: #{tpu_custom_call.1} parent=1 // pred_check
      _
    $region35: #{tpu_custom_call.1} parent=1 // pred_check_branch
      %82 = sbr.rel (0) target = $region37
    $region36: #{tpu_custom_call.1} parent=1 // pred_region
      %s84 = ssub.s32 128, 128
      %85 = vsyncadd [#allocation12], %s84
      %s87 = sshll.u32 [#allocation11], 4
      %s88 = int_to_ptr.vmem [resolvable:$true] %s87
      %90 = dma.hbm_to_vmem [thread:$0]  %s8, 128, %s88, [#allocation12]
    $region37: #{tpu_custom_call.1} parent=1 // pred_fallthru
      _
    // Predicated region
    $region38: #{tpu_custom_call.1} parent=1 // pred_check
      _
    $region39: #{tpu_custom_call.1} parent=1 // pred_check_branch
      %92 = sbr.rel (0) target = $region41
    $region40: #{tpu_custom_call.1} parent=1 // pred_region
      %s94 = ssub.s32 256, 256
      %95 = vsyncadd [#allocation12], %s94
      %s96 = sshll.u32 [#allocation13], 4
      %s97 = int_to_ptr.vmem [resolvable:$true] %s96
      %102 = dma.hbm_to_vmem [thread:$0]  %s9, 256, %s97, [#allocation12], 128, 128, 8
    $region41: #{tpu_custom_call.1} parent=1 // pred_fallthru
      _
    // Predicated region
    $region42: #{tpu_custom_call.1} parent=1 // pred_check
      _
    $region43: #{tpu_custom_call.1} parent=1 // pred_check_branch
      %104 = sbr.rel (0) target = $region45
    $region44: #{tpu_custom_call.1} parent=1 // pred_region
      _
    $region45: #{tpu_custom_call.1} parent=1 // pred_fallthru
      _
    // Predicated region
    $region46: #{tpu_custom_call.1} parent=1 // pred_check
      _
    $region47: #{tpu_custom_call.1} parent=1 // pred_check_branch
      %106 = sbr.rel (0) target = $region49
    $region48: #{tpu_custom_call.1} parent=1 // pred_region
      _
    $region49: #{tpu_custom_call.1} parent=1 // pred_fallthru
      _
    // Predicated region
    $region50: #{tpu_custom_call.1} parent=1 // pred_check
      _
    $region51: #{tpu_custom_call.1} parent=1 // pred_check_branch
      %108 = sbr.rel (0) target = $region53
    $region52: #{tpu_custom_call.1} parent=1 // pred_region
      _
    $region53: #{tpu_custom_call.1} parent=1 // pred_fallthru
      _
    // Predicated region
    $region54: #{tpu_custom_call.1} parent=1 // pred_check
      _
    $region55: #{tpu_custom_call.1} parent=1 // pred_check_branch
      %110 = sbr.rel (0) target = $region57
    $region56: #{tpu_custom_call.1} parent=1 // pred_region
      _
    $region57: #{tpu_custom_call.1} parent=1 // pred_fallthru
      _
    // Predicated region
    $region58: #{tpu_custom_call.1} parent=1 // pred_check
      _
    $region59: #{tpu_custom_call.1} parent=1 // pred_check_branch
      %112 = sbr.rel (0) target = $region61
    $region60: #{tpu_custom_call.1} parent=1 // pred_region
      _
    $region61: #{tpu_custom_call.1} parent=1 // pred_fallthru
      _
    // Predicated region
    $region62: #{tpu_custom_call.1} parent=1 // pred_check
      _
    $region63: #{tpu_custom_call.1} parent=1 // pred_check_branch
      %114 = sbr.rel (0) target = $region65
    $region64: #{tpu_custom_call.1} parent=1 // pred_region
      %115 = dma.done [#allocation3], 128
    $region65: #{tpu_custom_call.1} parent=1 // pred_fallthru
      _
    // Predicated region
    $region66: #{tpu_custom_call.1} parent=1 // pred_check
      _
    $region67: #{tpu_custom_call.1} parent=1 // pred_check_branch
      %117 = sbr.rel (0) target = $region69
    $region68: #{tpu_custom_call.1} parent=1 // pred_region
      %118 = dma.done [#allocation6], 128
    $region69: #{tpu_custom_call.1} parent=1 // pred_fallthru
      _
    // Predicated region
    $region70: #{tpu_custom_call.1} parent=1 // pred_check
      _
    $region71: #{tpu_custom_call.1} parent=1 // pred_check_branch
      %120 = sbr.rel (0) target = $region73
    $region72: #{tpu_custom_call.1} parent=1 // pred_region
      %121 = dma.done [#allocation6], 16
    $region73: #{tpu_custom_call.1} parent=1 // pred_fallthru
      _
    // Predicated region
    $region74: #{tpu_custom_call.1} parent=1 // pred_check
      _
    $region75: #{tpu_custom_call.1} parent=1 // pred_check_branch
      %123 = sbr.rel (0) target = $region77
    $region76: #{tpu_custom_call.1} parent=1 // pred_region
      %124 = dma.done [#allocation9], 16
    $region77: #{tpu_custom_call.1} parent=1 // pred_fallthru
      _
    // Predicated region
    $region78: #{tpu_custom_call.1} parent=1 // pred_check
      _
    $region79: #{tpu_custom_call.1} parent=1 // pred_check_branch
      %126 = sbr.rel (0) target = $region81
    $region80: #{tpu_custom_call.1} parent=1 // pred_region
      %127 = dma.done [#allocation9], 16
    $region81: #{tpu_custom_call.1} parent=1 // pred_fallthru
      _
    // Predicated region
    $region82: #{tpu_custom_call.1} parent=1 // pred_check
      _
    $region83: #{tpu_custom_call.1} parent=1 // pred_check_branch
      %129 = sbr.rel (0) target = $region85
    $region84: #{tpu_custom_call.1} parent=1 // pred_region
      %130 = dma.done [#allocation12], 128
    $region85: #{tpu_custom_call.1} parent=1 // pred_fallthru
      _
    // Predicated region
    $region86: #{tpu_custom_call.1} parent=1 // pred_check
      _
    $region87: #{tpu_custom_call.1} parent=1 // pred_check_branch
      %132 = sbr.rel (0) target = $region89
    $region88: #{tpu_custom_call.1} parent=1 // pred_region
      %133 = dma.done [#allocation12], 256
    $region89: #{tpu_custom_call.1} parent=1 // pred_fallthru
      _
    %v134 = vld [vmem:[#allocation2] sm:$0xff]
    %v135 = vld [vmem:[%s2] sm:$0xff]
    %v136 = vld [vmem:[%s2 + $0x8] sm:$0xff]
    %v137 = vld [vmem:[%s2 + $0x10] sm:$0xff]
    %v138 = vld [vmem:[%s2 + $0x18] sm:$0x3]
    %v139 = vld [vmem:[#allocation7] sm:$0x1]
    %v141 = vlaneseq
    %v142 = vshrl.u32 %v141, 7
    %v143 = vsub.s32 0, %v142
    %v144 = vrot.slane %v139, %v143
    %vm146 = vcmask 211968
    %v148 = vsel %vm146, %v134, 0
    %vm150 = vcmask 1041408
    %v152 = vsel %vm150, %v138, 0
    %154 = vmatprep.subr.mxu0 0.0
    %155 = vmatpush1.msra.mxu0 0.0
    %156 = vmatprep.subr.mxu0 0.0
    %157 = vmatpush1.msra.mxu0 0.0
    %158 = vmatprep.subr.mxu0 0.0
    %159 = vmatpush1.msra.mxu0 0.0
    %160 = vmatprep.subr.mxu0 0.0
    %161 = vmatpush1.msra.mxu0 0.0
    %162 = vmatprep.subr.mxu0 0.0
    %163 = vmatpush1.msra.mxu0 0.0
    %164 = vmatprep.subr.mxu0 0.0
    %165 = vmatpush1.msra.mxu0 0.0
    %166 = vmatprep.subr.mxu0 0.0
    %167 = vmatpush1.msra.mxu0 0.0
    %168 = vmatprep.subr.mxu0 0.0
    %169 = vmatpush1.msra.mxu0 0.0
    %170 = vmatprep.subr.mxu0 0.0
    %171 = vmatpush1.msra.mxu0 0.0
    %172 = vmatprep.subr.mxu0 0.0
    %173 = vmatpush1.msra.mxu0 0.0
    %174 = vmatprep.subr.mxu0 0.0
    %175 = vmatpush1.msra.mxu0 0.0
    %176 = vmatprep.subr.mxu0 0.0
    %177 = vmatpush1.msra.mxu0 0.0
    %178 = vmatprep.subr.mxu0 0.0
    %179 = vmatpush1.msra.mxu0 %v152
    %180 = vmatprep.subr.mxu0 0.0
    %181 = vmatpush1.msra.mxu0 %v137
    %182 = vmatprep.subr.mxu0 0.0
    %183 = vmatpush1.msra.mxu0 %v136
    %184 = vmatprep.subr.mxu0 0.0
    %185 = vmatpush1.msra.mxu0 %v135
    %186 = vmatprep.subr.mxu0 0.0
    %187 = vmatpush2.msra.mxu0 0.0
    %188 = vmatprep.subr.mxu0 0.0
    %189 = vmatpush2.msra.mxu0 0.0
    %190 = vmatprep.subr.mxu0 0.0
    %191 = vmatpush2.msra.mxu0 0.0
    %192 = vmatprep.subr.mxu0 0.0
    %193 = vmatpush2.msra.mxu0 0.0
    %194 = vmatprep.subr.mxu0 0.0
    %195 = vmatpush2.msra.mxu0 0.0
    %196 = vmatprep.subr.mxu0 0.0
    %197 = vmatpush2.msra.mxu0 0.0
    %198 = vmatprep.subr.mxu0 0.0
    %199 = vmatpush2.msra.mxu0 0.0
    %200 = vmatprep.subr.mxu0 0.0
    %201 = vmatpush2.msra.mxu0 0.0
    %202 = vmatprep.subr.mxu0 0.0
    %203 = vmatpush2.msra.mxu0 0.0
    %204 = vmatprep.subr.mxu0 0.0
    %205 = vmatpush2.msra.mxu0 0.0
    %206 = vmatprep.subr.mxu0 0.0
    %207 = vmatpush2.msra.mxu0 0.0
    %208 = vmatprep.subr.mxu0 0.0
    %209 = vmatpush2.msra.mxu0 0.0
    %210 = vmatprep.subr.mxu0 0.0
    %211 = vmatpush2.msra.mxu0 0.0
    %212 = vmatprep.subr.mxu0 0.0
    %213 = vmatpush2.msra.mxu0 0.0
    %214 = vmatprep.subr.mxu0 0.0
    %215 = vmatpush2.msra.mxu0 0.0
    %216 = vmatprep.subr.mxu0 0.0
    %217 = vmatpush2.msra.mxu0 0.0
    %218 = vmatprep.mubr.f32.mxu0 0.0
    %219 = vmatmul.mubr.f32.gmra.mxu0 %v148
    %v220 = vpop.f32.mrf.mxu0
    %v221 = vadd.f32 %v144, %v220
    %v222 = vpop.f32.mrf.mxu0
    %223 = vdwg.mxu0
    %v224 = vmax.f32 %v221, 0.0
    %v225 = vand.u32 2147483647, %v221
    %v226 = vsub.f32 0.0, %v225
    %v227 = vmul.f32 %v226, 1.442695
    %v228 = vpow.pop %v227
    %v229 = vadd.f32 %v228, 1.0
    %v230 = vlog2.pop %v229
    %v231 = vmul.f32 %v230, 0.6931472
    %v232 = vmul.f32 -0.5, %v228
    %v233 = vadd.f32 %v232, 1.0
    %v234 = vmul.f32 %v233, %v228
    %v235 = vand.u32 2147483647, %v228
    %vm236 = vcmp.lt.f32.partialorder %v235, 0.0004427343
    %v237 = vsel %vm236, %v234, %v231
    %v238 = vadd.f32 %v224, %v237
    %v239 = vld [vmem:[%s4] sm:$0xff]
    %v240 = vld [vmem:[%s4 + $0x8] sm:$0xff]
    %v241 = vld [vmem:[%s4 + $0x10] sm:$0xff]
    %v242 = vld [vmem:[%s4 + $0x18] sm:$0xff]
    %v243 = vld [vmem:[#allocation8] sm:$0x1]
    %v245 = vlaneseq
    %v246 = vshrl.u32 %v245, 7
    %v247 = vsub.s32 0, %v246
    %v248 = vrot.slane %v243, %v247
    %vm250 = vcmask 261120
    %v252 = vsel %vm250, %v238, 0
    %254 = vmatprep.subr.mxu0 0.0
    %255 = vmatpush1.msra.mxu0 0.0
    %256 = vmatprep.subr.mxu0 0.0
    %257 = vmatpush1.msra.mxu0 0.0
    %258 = vmatprep.subr.mxu0 0.0
    %259 = vmatpush1.msra.mxu0 0.0
    %260 = vmatprep.subr.mxu0 0.0
    %261 = vmatpush1.msra.mxu0 0.0
    %262 = vmatprep.subr.mxu0 0.0
    %263 = vmatpush1.msra.mxu0 0.0
    %264 = vmatprep.subr.mxu0 0.0
    %265 = vmatpush1.msra.mxu0 0.0
    %266 = vmatprep.subr.mxu0 0.0
    %267 = vmatpush1.msra.mxu0 0.0
    %268 = vmatprep.subr.mxu0 0.0
    %269 = vmatpush1.msra.mxu0 0.0
    %270 = vmatprep.subr.mxu0 0.0
    %271 = vmatpush1.msra.mxu0 0.0
    %272 = vmatprep.subr.mxu0 0.0
    %273 = vmatpush1.msra.mxu0 0.0
    %274 = vmatprep.subr.mxu0 0.0
    %275 = vmatpush1.msra.mxu0 0.0
    %276 = vmatprep.subr.mxu0 0.0
    %277 = vmatpush1.msra.mxu0 0.0
    %278 = vmatprep.subr.mxu0 0.0
    %279 = vmatpush1.msra.mxu0 %v242
    %280 = vmatprep.subr.mxu0 0.0
    %281 = vmatpush1.msra.mxu0 %v241
    %282 = vmatprep.subr.mxu0 0.0
    %283 = vmatpush1.msra.mxu0 %v240
    %284 = vmatprep.subr.mxu0 0.0
    %285 = vmatpush1.msra.mxu0 %v239
    %286 = vmatprep.subr.mxu0 0.0
    %287 = vmatpush2.msra.mxu0 0.0
    %288 = vmatprep.subr.mxu0 0.0
    %289 = vmatpush2.msra.mxu0 0.0
    %290 = vmatprep.subr.mxu0 0.0
    %291 = vmatpush2.msra.mxu0 0.0
    %292 = vmatprep.subr.mxu0 0.0
    %293 = vmatpush2.msra.mxu0 0.0
    %294 = vmatprep.subr.mxu0 0.0
    %295 = vmatpush2.msra.mxu0 0.0
    %296 = vmatprep.subr.mxu0 0.0
    %297 = vmatpush2.msra.mxu0 0.0
    %298 = vmatprep.subr.mxu0 0.0
    %299 = vmatpush2.msra.mxu0 0.0
    %300 = vmatprep.subr.mxu0 0.0
    %301 = vmatpush2.msra.mxu0 0.0
    %302 = vmatprep.subr.mxu0 0.0
    %303 = vmatpush2.msra.mxu0 0.0
    %304 = vmatprep.subr.mxu0 0.0
    %305 = vmatpush2.msra.mxu0 0.0
    %306 = vmatprep.subr.mxu0 0.0
    %307 = vmatpush2.msra.mxu0 0.0
    %308 = vmatprep.subr.mxu0 0.0
    %309 = vmatpush2.msra.mxu0 0.0
    %310 = vmatprep.subr.mxu0 0.0
    %311 = vmatpush2.msra.mxu0 0.0
    %312 = vmatprep.subr.mxu0 0.0
    %313 = vmatpush2.msra.mxu0 0.0
    %314 = vmatprep.subr.mxu0 0.0
    %315 = vmatpush2.msra.mxu0 0.0
    %316 = vmatprep.subr.mxu0 0.0
    %317 = vmatpush2.msra.mxu0 0.0
    %318 = vmatprep.mubr.f32.mxu0 0.0
    %319 = vmatmul.mubr.f32.gmra.mxu0 %v252
    %v320 = vpop.f32.mrf.mxu0
    %v321 = vadd.f32 %v248, %v320
    %v322 = vpop.f32.mrf.mxu0
    %323 = vdwg.mxu0
    %v324 = vmax.f32 %v321, 0.0
    %v325 = vand.u32 2147483647, %v321
    %v326 = vsub.f32 0.0, %v325
    %v327 = vmul.f32 %v326, 1.442695
    %v328 = vpow.pop %v327
    %v329 = vadd.f32 %v328, 1.0
    %v330 = vlog2.pop %v329
    %v331 = vmul.f32 %v330, 0.6931472
    %v332 = vmul.f32 -0.5, %v328
    %v333 = vadd.f32 %v332, 1.0
    %v334 = vmul.f32 %v333, %v328
    %v335 = vand.u32 2147483647, %v328
    %vm336 = vcmp.lt.f32.partialorder %v335, 0.0004427343
    %v337 = vsel %vm336, %v334, %v331
    %v338 = vadd.f32 %v324, %v337
    %v339 = vld [vmem:[%s6] sm:$0xff]
    %v340 = vld [vmem:[%s6 + $0x8] sm:$0xff]
    %v341 = vld [vmem:[%s6 + $0x10] sm:$0xff]
    %v342 = vld [vmem:[%s6 + $0x18] sm:$0xff]
    %v343 = vld [vmem:[#allocation10] sm:$0x1]
    %v345 = vlaneseq
    %v346 = vshrl.u32 %v345, 7
    %v347 = vsub.s32 0, %v346
    %v348 = vrot.slane %v343, %v347
    %v351 = vsel %vm250, %v338, 0
    %353 = vmatprep.subr.mxu0 0.0
    %354 = vmatpush1.msra.mxu0 0.0
    %355 = vmatprep.subr.mxu0 0.0
    %356 = vmatpush1.msra.mxu0 0.0
    %357 = vmatprep.subr.mxu0 0.0
    %358 = vmatpush1.msra.mxu0 0.0
    %359 = vmatprep.subr.mxu0 0.0
    %360 = vmatpush1.msra.mxu0 0.0
    %361 = vmatprep.subr.mxu0 0.0
    %362 = vmatpush1.msra.mxu0 0.0
    %363 = vmatprep.subr.mxu0 0.0
    %364 = vmatpush1.msra.mxu0 0.0
    %365 = vmatprep.subr.mxu0 0.0
    %366 = vmatpush1.msra.mxu0 0.0
    %367 = vmatprep.subr.mxu0 0.0
    %368 = vmatpush1.msra.mxu0 0.0
    %369 = vmatprep.subr.mxu0 0.0
    %370 = vmatpush1.msra.mxu0 0.0
    %371 = vmatprep.subr.mxu0 0.0
    %372 = vmatpush1.msra.mxu0 0.0
    %373 = vmatprep.subr.mxu0 0.0
    %374 = vmatpush1.msra.mxu0 0.0
    %375 = vmatprep.subr.mxu0 0.0
    %376 = vmatpush1.msra.mxu0 0.0
    %377 = vmatprep.subr.mxu0 0.0
    %378 = vmatpush1.msra.mxu0 %v342
    %379 = vmatprep.subr.mxu0 0.0
    %380 = vmatpush1.msra.mxu0 %v341
    %381 = vmatprep.subr.mxu0 0.0
    %382 = vmatpush1.msra.mxu0 %v340
    %383 = vmatprep.subr.mxu0 0.0
    %384 = vmatpush1.msra.mxu0 %v339
    %385 = vmatprep.subr.mxu0 0.0
    %386 = vmatpush2.msra.mxu0 0.0
    %387 = vmatprep.subr.mxu0 0.0
    %388 = vmatpush2.msra.mxu0 0.0
    %389 = vmatprep.subr.mxu0 0.0
    %390 = vmatpush2.msra.mxu0 0.0
    %391 = vmatprep.subr.mxu0 0.0
    %392 = vmatpush2.msra.mxu0 0.0
    %393 = vmatprep.subr.mxu0 0.0
    %394 = vmatpush2.msra.mxu0 0.0
    %395 = vmatprep.subr.mxu0 0.0
    %396 = vmatpush2.msra.mxu0 0.0
    %397 = vmatprep.subr.mxu0 0.0
    %398 = vmatpush2.msra.mxu0 0.0
    %399 = vmatprep.subr.mxu0 0.0
    %400 = vmatpush2.msra.mxu0 0.0
    %401 = vmatprep.subr.mxu0 0.0
    %402 = vmatpush2.msra.mxu0 0.0
    %403 = vmatprep.subr.mxu0 0.0
    %404 = vmatpush2.msra.mxu0 0.0
    %405 = vmatprep.subr.mxu0 0.0
    %406 = vmatpush2.msra.mxu0 0.0
    %407 = vmatprep.subr.mxu0 0.0
    %408 = vmatpush2.msra.mxu0 0.0
    %409 = vmatprep.subr.mxu0 0.0
    %410 = vmatpush2.msra.mxu0 0.0
    %411 = vmatprep.subr.mxu0 0.0
    %412 = vmatpush2.msra.mxu0 0.0
    %413 = vmatprep.subr.mxu0 0.0
    %414 = vmatpush2.msra.mxu0 0.0
    %415 = vmatprep.subr.mxu0 0.0
    %416 = vmatpush2.msra.mxu0 0.0
    %417 = vmatprep.mubr.f32.mxu0 0.0
    %418 = vmatmul.mubr.f32.gmra.mxu0 %v351
    %v419 = vpop.f32.mrf.mxu0
    %v420 = vadd.f32 %v348, %v419
    %v421 = vpop.f32.mrf.mxu0
    %422 = vdwg.mxu0
    %v423 = vmax.f32 %v420, 0.0
    %v424 = vand.u32 2147483647, %v420
    %v425 = vsub.f32 0.0, %v424
    %v426 = vmul.f32 %v425, 1.442695
    %v427 = vpow.pop %v426
    %v428 = vadd.f32 %v427, 1.0
    %v429 = vlog2.pop %v428
    %v430 = vmul.f32 %v429, 0.6931472
    %v431 = vmul.f32 -0.5, %v427
    %v432 = vadd.f32 %v431, 1.0
    %v433 = vmul.f32 %v432, %v427
    %v434 = vand.u32 2147483647, %v427
    %vm435 = vcmp.lt.f32.partialorder %v434, 0.0004427343
    %v436 = vsel %vm435, %v433, %v430
    %v437 = vadd.f32 %v423, %v436
    %v438 = vld [vmem:[#allocation5] sm:$0xff]
    %v439 = vmul.f32 %v437, 0.5
    %v440 = vmul.f32 %v439, 1.442695
    %v441 = vpow.pop %v440
    %443 = vrot.lane.b32.xlu0 %v441, 120
    %v444 = vpop.permute.xlu0 %443
    %v446 = vmul.f32 %v438, %v444
    %v447 = vadd.f32 %v420, %v446
    %v448 = vld [vmem:[#allocation11] sm:$0xff]
    %v449 = vld [vmem:[#allocation13] sm:$0xff]
    %v450 = vld [vmem:[#allocation13 + $0x8] sm:$0x3]
    %451 = vrot.lane.b32.xlu0 %v134, 112
    %v452 = vpop.permute.xlu0 %451
    %vm453 = vcmask 80896
    %v454 = vsel %vm453, %v452, 0
    %v457 = vsel %vm150, %v450, 0
    %459 = vmatprep.subr.mxu0 0.0
    %460 = vmatpush1.msra.mxu0 0.0
    %461 = vmatprep.subr.mxu0 0.0
    %462 = vmatpush1.msra.mxu0 0.0
    %463 = vmatprep.subr.mxu0 0.0
    %464 = vmatpush1.msra.mxu0 0.0
    %465 = vmatprep.subr.mxu0 0.0
    %466 = vmatpush1.msra.mxu0 0.0
    %467 = vmatprep.subr.mxu0 0.0
    %468 = vmatpush1.msra.mxu0 0.0
    %469 = vmatprep.subr.mxu0 0.0
    %470 = vmatpush1.msra.mxu0 0.0
    %471 = vmatprep.subr.mxu0 0.0
    %472 = vmatpush1.msra.mxu0 0.0
    %473 = vmatprep.subr.mxu0 0.0
    %474 = vmatpush1.msra.mxu0 0.0
    %475 = vmatprep.subr.mxu0 0.0
    %476 = vmatpush1.msra.mxu0 0.0
    %477 = vmatprep.subr.mxu0 0.0
    %478 = vmatpush1.msra.mxu0 0.0
    %479 = vmatprep.subr.mxu0 0.0
    %480 = vmatpush1.msra.mxu0 0.0
    %481 = vmatprep.subr.mxu0 0.0
    %482 = vmatpush1.msra.mxu0 0.0
    %483 = vmatprep.subr.mxu0 0.0
    %484 = vmatpush1.msra.mxu0 0.0
    %485 = vmatprep.subr.mxu0 0.0
    %486 = vmatpush1.msra.mxu0 0.0
    %487 = vmatprep.subr.mxu0 0.0
    %488 = vmatpush1.msra.mxu0 %v457
    %489 = vmatprep.subr.mxu0 0.0
    %490 = vmatpush1.msra.mxu0 %v449
    %491 = vmatprep.subr.mxu0 0.0
    %492 = vmatpush2.msra.mxu0 0.0
    %493 = vmatprep.subr.mxu0 0.0
    %494 = vmatpush2.msra.mxu0 0.0
    %495 = vmatprep.subr.mxu0 0.0
    %496 = vmatpush2.msra.mxu0 0.0
    %497 = vmatprep.subr.mxu0 0.0
    %498 = vmatpush2.msra.mxu0 0.0
    %499 = vmatprep.subr.mxu0 0.0
    %500 = vmatpush2.msra.mxu0 0.0
    %501 = vmatprep.subr.mxu0 0.0
    %502 = vmatpush2.msra.mxu0 0.0
    %503 = vmatprep.subr.mxu0 0.0
    %504 = vmatpush2.msra.mxu0 0.0
    %505 = vmatprep.subr.mxu0 0.0
    %506 = vmatpush2.msra.mxu0 0.0
    %507 = vmatprep.subr.mxu0 0.0
    %508 = vmatpush2.msra.mxu0 0.0
    %509 = vmatprep.subr.mxu0 0.0
    %510 = vmatpush2.msra.mxu0 0.0
    %511 = vmatprep.subr.mxu0 0.0
    %512 = vmatpush2.msra.mxu0 0.0
    %513 = vmatprep.subr.mxu0 0.0
    %514 = vmatpush2.msra.mxu0 0.0
    %515 = vmatprep.subr.mxu0 0.0
    %516 = vmatpush2.msra.mxu0 0.0
    %517 = vmatprep.subr.mxu0 0.0
    %518 = vmatpush2.msra.mxu0 0.0
    %519 = vmatprep.subr.mxu0 0.0
    %520 = vmatpush2.msra.mxu0 0.0
    %521 = vmatprep.subr.mxu0 0.0
    %522 = vmatpush2.msra.mxu0 0.0
    %523 = vmatprep.mubr.f32.mxu0 0.0
    %524 = vmatmul.mubr.f32.gmra.mxu0 %v454
    %v525 = vpop.f32.mrf.mxu0
    %v526 = vadd.f32 0.0, %v525
    %v527 = vpop.f32.mrf.mxu0
    %528 = vdwg.mxu0
    %vm529 = vcmask 64512
    %v531 = vsel %vm529, %v447, 0
    %533 = vmatprep.subr.mxu0 0.0
    %534 = vmatpush1.msra.mxu0 0.0
    %535 = vmatprep.subr.mxu0 0.0
    %536 = vmatpush1.msra.mxu0 0.0
    %537 = vmatprep.subr.mxu0 0.0
    %538 = vmatpush1.msra.mxu0 0.0
    %539 = vmatprep.subr.mxu0 0.0
    %540 = vmatpush1.msra.mxu0 0.0
    %541 = vmatprep.subr.mxu0 0.0
    %542 = vmatpush1.msra.mxu0 0.0
    %543 = vmatprep.subr.mxu0 0.0
    %544 = vmatpush1.msra.mxu0 0.0
    %545 = vmatprep.subr.mxu0 0.0
    %546 = vmatpush1.msra.mxu0 0.0
    %547 = vmatprep.subr.mxu0 0.0
    %548 = vmatpush1.msra.mxu0 0.0
    %549 = vmatprep.subr.mxu0 0.0
    %550 = vmatpush1.msra.mxu0 0.0
    %551 = vmatprep.subr.mxu0 0.0
    %552 = vmatpush1.msra.mxu0 0.0
    %553 = vmatprep.subr.mxu0 0.0
    %554 = vmatpush1.msra.mxu0 0.0
    %555 = vmatprep.subr.mxu0 0.0
    %556 = vmatpush1.msra.mxu0 0.0
    %557 = vmatprep.subr.mxu0 0.0
    %558 = vmatpush1.msra.mxu0 0.0
    %559 = vmatprep.subr.mxu0 0.0
    %560 = vmatpush1.msra.mxu0 0.0
    %561 = vmatprep.subr.mxu0 0.0
    %562 = vmatpush1.msra.mxu0 0.0
    %563 = vmatprep.subr.mxu0 0.0
    %564 = vmatpush1.msra.mxu0 %v448
    %565 = vmatprep.subr.mxu0 0.0
    %566 = vmatpush2.msra.mxu0 0.0
    %567 = vmatprep.subr.mxu0 0.0
    %568 = vmatpush2.msra.mxu0 0.0
    %569 = vmatprep.subr.mxu0 0.0
    %570 = vmatpush2.msra.mxu0 0.0
    %571 = vmatprep.subr.mxu0 0.0
    %572 = vmatpush2.msra.mxu0 0.0
    %573 = vmatprep.subr.mxu0 0.0
    %574 = vmatpush2.msra.mxu0 0.0
    %575 = vmatprep.subr.mxu0 0.0
    %576 = vmatpush2.msra.mxu0 0.0
    %577 = vmatprep.subr.mxu0 0.0
    %578 = vmatpush2.msra.mxu0 0.0
    %579 = vmatprep.subr.mxu0 0.0
    %580 = vmatpush2.msra.mxu0 0.0
    %581 = vmatprep.subr.mxu0 0.0
    %582 = vmatpush2.msra.mxu0 0.0
    %583 = vmatprep.subr.mxu0 0.0
    %584 = vmatpush2.msra.mxu0 0.0
    %585 = vmatprep.subr.mxu0 0.0
    %586 = vmatpush2.msra.mxu0 0.0
    %587 = vmatprep.subr.mxu0 0.0
    %588 = vmatpush2.msra.mxu0 0.0
    %589 = vmatprep.subr.mxu0 0.0
    %590 = vmatpush2.msra.mxu0 0.0
    %591 = vmatprep.subr.mxu0 0.0
    %592 = vmatpush2.msra.mxu0 0.0
    %593 = vmatprep.subr.mxu0 0.0
    %594 = vmatpush2.msra.mxu0 0.0
    %595 = vmatprep.subr.mxu0 0.0
    %596 = vmatpush2.msra.mxu0 0.0
    %597 = vmatprep.mubr.f32.mxu0 0.0
    %598 = vmatmul.mubr.f32.gmra.mxu0 %v531
    %v599 = vpop.f32.mrf.mxu0
    %v600 = vadd.f32 %v526, %v599
    %v601 = vpop.f32.mrf.mxu0
    %602 = vdwg.mxu0
    %v603 = vld [vmem:[%s10] sm:$0x1]
    %v605 = vlaneseq
    %v606 = vshrl.u32 %v605, 7
    %v607 = vsub.s32 0, %v606
    %v608 = vrot.slane %v603, %v607
    %v610 = vadd.f32 %v600, %v608
    %v611 = vmax.f32 %v610, 0.0
    %v612 = vand.u32 2147483647, %v610
    %v613 = vsub.f32 0.0, %v612
    %v614 = vmul.f32 %v613, 1.442695
    %v615 = vpow.pop %v614
    %v616 = vadd.f32 %v615, 1.0
    %v617 = vlog2.pop %v616
    %v618 = vmul.f32 %v617, 0.6931472
    %v619 = vmul.f32 -0.5, %v615
    %v620 = vadd.f32 %v619, 1.0
    %v621 = vmul.f32 %v620, %v615
    %v622 = vand.u32 2147483647, %v615
    %vm623 = vcmp.lt.f32.partialorder %v622, 0.0004427343
    %v624 = vsel %vm623, %v621, %v618
    %v625 = vadd.f32 %v611, %v624
    %v626 = vld [vmem:[%s11] sm:$0xff]
    %v627 = vld [vmem:[%s11 + $0x8] sm:$0xff]
    %v628 = vld [vmem:[%s11 + $0x10] sm:$0xff]
    %v629 = vld [vmem:[%s11 + $0x18] sm:$0xff]
    %v630 = vld [vmem:[%s12] sm:$0x1]
    %v632 = vlaneseq
    %v633 = vshrl.u32 %v632, 7
    %v634 = vsub.s32 0, %v633
    %v635 = vrot.slane %v630, %v634
    %v638 = vsel %vm250, %v625, 0
    %640 = vmatprep.subr.mxu0 0.0
    %641 = vmatpush1.msra.mxu0 0.0
    %642 = vmatprep.subr.mxu0 0.0
    %643 = vmatpush1.msra.mxu0 0.0
    %644 = vmatprep.subr.mxu0 0.0
    %645 = vmatpush1.msra.mxu0 0.0
    %646 = vmatprep.subr.mxu0 0.0
    %647 = vmatpush1.msra.mxu0 0.0
    %648 = vmatprep.subr.mxu0 0.0
    %649 = vmatpush1.msra.mxu0 0.0
    %650 = vmatprep.subr.mxu0 0.0
    %651 = vmatpush1.msra.mxu0 0.0
    %652 = vmatprep.subr.mxu0 0.0
    %653 = vmatpush1.msra.mxu0 0.0
    %654 = vmatprep.subr.mxu0 0.0
    %655 = vmatpush1.msra.mxu0 0.0
    %656 = vmatprep.subr.mxu0 0.0
    %657 = vmatpush1.msra.mxu0 0.0
    %658 = vmatprep.subr.mxu0 0.0
    %659 = vmatpush1.msra.mxu0 0.0
    %660 = vmatprep.subr.mxu0 0.0
    %661 = vmatpush1.msra.mxu0 0.0
    %662 = vmatprep.subr.mxu0 0.0
    %663 = vmatpush1.msra.mxu0 0.0
    %664 = vmatprep.subr.mxu0 0.0
    %665 = vmatpush1.msra.mxu0 %v629
    %666 = vmatprep.subr.mxu0 0.0
    %667 = vmatpush1.msra.mxu0 %v628
    %668 = vmatprep.subr.mxu0 0.0
    %669 = vmatpush1.msra.mxu0 %v627
    %670 = vmatprep.subr.mxu0 0.0
    %671 = vmatpush1.msra.mxu0 %v626
    %672 = vmatprep.subr.mxu0 0.0
    %673 = vmatpush2.msra.mxu0 0.0
    %674 = vmatprep.subr.mxu0 0.0
    %675 = vmatpush2.msra.mxu0 0.0
    %676 = vmatprep.subr.mxu0 0.0
    %677 = vmatpush2.msra.mxu0 0.0
    %678 = vmatprep.subr.mxu0 0.0
    %679 = vmatpush2.msra.mxu0 0.0
    %680 = vmatprep.subr.mxu0 0.0
    %681 = vmatpush2.msra.mxu0 0.0
    %682 = vmatprep.subr.mxu0 0.0
    %683 = vmatpush2.msra.mxu0 0.0
    %684 = vmatprep.subr.mxu0 0.0
    %685 = vmatpush2.msra.mxu0 0.0
    %686 = vmatprep.subr.mxu0 0.0
    %687 = vmatpush2.msra.mxu0 0.0
    %688 = vmatprep.subr.mxu0 0.0
    %689 = vmatpush2.msra.mxu0 0.0
    %690 = vmatprep.subr.mxu0 0.0
    %691 = vmatpush2.msra.mxu0 0.0
    %692 = vmatprep.subr.mxu0 0.0
    %693 = vmatpush2.msra.mxu0 0.0
    %694 = vmatprep.subr.mxu0 0.0
    %695 = vmatpush2.msra.mxu0 0.0
    %696 = vmatprep.subr.mxu0 0.0
    %697 = vmatpush2.msra.mxu0 0.0
    %698 = vmatprep.subr.mxu0 0.0
    %699 = vmatpush2.msra.mxu0 0.0
    %700 = vmatprep.subr.mxu0 0.0
    %701 = vmatpush2.msra.mxu0 0.0
    %702 = vmatprep.subr.mxu0 0.0
    %703 = vmatpush2.msra.mxu0 0.0
    %704 = vmatprep.mubr.f32.mxu0 0.0
    %705 = vmatmul.mubr.f32.gmra.mxu0 %v638
    %v706 = vpop.f32.mrf.mxu0
    %v707 = vadd.f32 %v635, %v706
    %v708 = vpop.f32.mrf.mxu0
    %709 = vdwg.mxu0
    %v710 = vmax.f32 %v707, 0.0
    %v711 = vand.u32 2147483647, %v707
    %v712 = vsub.f32 0.0, %v711
    %v713 = vmul.f32 %v712, 1.442695
    %v714 = vpow.pop %v713
    %v715 = vadd.f32 %v714, 1.0
    %v716 = vlog2.pop %v715
    %v717 = vmul.f32 %v716, 0.6931472
    %v718 = vmul.f32 -0.5, %v714
    %v719 = vadd.f32 %v718, 1.0
    %v720 = vmul.f32 %v719, %v714
    %v721 = vand.u32 2147483647, %v714
    %vm722 = vcmp.lt.f32.partialorder %v721, 0.0004427343
    %v723 = vsel %vm722, %v720, %v717
    %v724 = vadd.f32 %v710, %v723
    %v725 = vld [vmem:[%s13] sm:$0xff]
    %v726 = vld [vmem:[%s13 + $0x8] sm:$0xff]
    %v727 = vld [vmem:[%s13 + $0x10] sm:$0xff]
    %v728 = vld [vmem:[%s13 + $0x18] sm:$0xff]
    %v729 = vld [vmem:[%s14] sm:$0x1]
    %v731 = vlaneseq
    %v732 = vshrl.u32 %v731, 7
    %v733 = vsub.s32 0, %v732
    %v734 = vrot.slane %v729, %v733
    %v737 = vsel %vm250, %v724, 0
    %739 = vmatprep.subr.mxu0 0.0
    %740 = vmatpush1.msra.mxu0 0.0
    %741 = vmatprep.subr.mxu0 0.0
    %742 = vmatpush1.msra.mxu0 0.0
    %743 = vmatprep.subr.mxu0 0.0
    %744 = vmatpush1.msra.mxu0 0.0
    %745 = vmatprep.subr.mxu0 0.0
    %746 = vmatpush1.msra.mxu0 0.0
    %747 = vmatprep.subr.mxu0 0.0
    %748 = vmatpush1.msra.mxu0 0.0
    %749 = vmatprep.subr.mxu0 0.0
    %750 = vmatpush1.msra.mxu0 0.0
    %751 = vmatprep.subr.mxu0 0.0
    %752 = vmatpush1.msra.mxu0 0.0
    %753 = vmatprep.subr.mxu0 0.0
    %754 = vmatpush1.msra.mxu0 0.0
    %755 = vmatprep.subr.mxu0 0.0
    %756 = vmatpush1.msra.mxu0 0.0
    %757 = vmatprep.subr.mxu0 0.0
    %758 = vmatpush1.msra.mxu0 0.0
    %759 = vmatprep.subr.mxu0 0.0
    %760 = vmatpush1.msra.mxu0 0.0
    %761 = vmatprep.subr.mxu0 0.0
    %762 = vmatpush1.msra.mxu0 0.0
    %763 = vmatprep.subr.mxu0 0.0
    %764 = vmatpush1.msra.mxu0 %v728
    %765 = vmatprep.subr.mxu0 0.0
    %766 = vmatpush1.msra.mxu0 %v727
    %767 = vmatprep.subr.mxu0 0.0
    %768 = vmatpush1.msra.mxu0 %v726
    %769 = vmatprep.subr.mxu0 0.0
    %770 = vmatpush1.msra.mxu0 %v725
    %771 = vmatprep.subr.mxu0 0.0
    %772 = vmatpush2.msra.mxu0 0.0
    %773 = vmatprep.subr.mxu0 0.0
    %774 = vmatpush2.msra.mxu0 0.0
    %775 = vmatprep.subr.mxu0 0.0
    %776 = vmatpush2.msra.mxu0 0.0
    %777 = vmatprep.subr.mxu0 0.0
    %778 = vmatpush2.msra.mxu0 0.0
    %779 = vmatprep.subr.mxu0 0.0
    %780 = vmatpush2.msra.mxu0 0.0
    %781 = vmatprep.subr.mxu0 0.0
    %782 = vmatpush2.msra.mxu0 0.0
    %783 = vmatprep.subr.mxu0 0.0
    %784 = vmatpush2.msra.mxu0 0.0
    %785 = vmatprep.subr.mxu0 0.0
    %786 = vmatpush2.msra.mxu0 0.0
    %787 = vmatprep.subr.mxu0 0.0
    %788 = vmatpush2.msra.mxu0 0.0
    %789 = vmatprep.subr.mxu0 0.0
    %790 = vmatpush2.msra.mxu0 0.0
    %791 = vmatprep.subr.mxu0 0.0
    %792 = vmatpush2.msra.mxu0 0.0
    %793 = vmatprep.subr.mxu0 0.0
    %794 = vmatpush2.msra.mxu0 0.0
    %795 = vmatprep.subr.mxu0 0.0
    %796 = vmatpush2.msra.mxu0 0.0
    %797 = vmatprep.subr.mxu0 0.0
    %798 = vmatpush2.msra.mxu0 0.0
    %799 = vmatprep.subr.mxu0 0.0
    %800 = vmatpush2.msra.mxu0 0.0
    %801 = vmatprep.subr.mxu0 0.0
    %802 = vmatpush2.msra.mxu0 0.0
    %803 = vmatprep.mubr.f32.mxu0 0.0
    %804 = vmatmul.mubr.f32.gmra.mxu0 %v737
    %v805 = vpop.f32.mrf.mxu0
    %v806 = vadd.f32 %v734, %v805
    %v807 = vpop.f32.mrf.mxu0
    %808 = vdwg.mxu0
    %v809 = vxor.u32 %v806, 2147483648
    %v810 = vmul.f32 %v809, 1.442695
    %v811 = vpow.pop %v810
    %v812 = vadd.f32 %v811, 1.0
    %v813 = vrcp.pop %v812
    %v814 = vmul.f32 1.0, %v813
    %816 = vrot.lane.b32.xlu0 %v420, 16
    %v817 = vpop.permute.xlu0 %816
    %820 = vrot.lane.b32.xlu0 %v437, 16
    %v821 = vpop.permute.xlu0 %820
    %vm823 = vcmask 130048
    %v824 = vsel %vm823, %v814, %v817
    %vm825 = vcmask 195584
    %v826 = vsel %vm825, %v824, %v821
    %827 = vst.msk [vmem:[#allocation14] sm:$0xff] %vm250, %v826
    // Predicated region
    $region90: #{tpu_custom_call.1} parent=1 // pred_check
      _
    $region91: #{tpu_custom_call.1} parent=1 // pred_check_branch
      %829 = sbr.rel (0) target = $region93
    $region92: #{tpu_custom_call.1} parent=1 // pred_region
      %s831 = ssub.s32 128, 128
      %832 = vsyncadd [#allocation4], %s831
      %s834 = sshll.u32 [#allocation14], 4
      %s835 = int_to_ptr.vmem [resolvable:$true] %s834
      %837 = dma.vmem_to_hbm [thread:$0]  %s835, 128, %s15, [#allocation4]
    $region93: #{tpu_custom_call.1} parent=1 // pred_fallthru
      _
    // Predicated region
    $region94: #{tpu_custom_call.1} parent=1 // pred_check
      _
    $region95: #{tpu_custom_call.1} parent=1 // pred_check_branch
      %839 = sbr.rel (0) target = $region97
    $region96: #{tpu_custom_call.1} parent=1 // pred_region
      %840 = dma.done [#allocation4], 128
    $region97: #{tpu_custom_call.1} parent=1 // pred_fallthru
      _
    %841 = vsyncpa [#allocation3], 1
    %842 = vsyncpa [#allocation6], 1
    %843 = vsyncpa [#allocation9], 1
    %844 = vsyncpa [#allocation12], 1
    %845 = vsyncpa [#allocation4], 1

</llo_original>
